<compile_context>
chip_gen: v7x
topology: tpu7x:2x2x1
jax: 0.10.0
libtpu: 0.0.40
codegen_flags: <defaults>
</compile_context>

<pallas_src>
import functools

import jax
import jax.numpy as jnp
from jax.experimental import pallas as pl
from jax.experimental.pallas import tpu as pltpu

LANE = 128
SUBLANE_BF16 = 16  # bf16 packs 2 rows per 32-bit sublane -> tile rows in 16s


def _round_up(n: int, m: int) -> int:
    return ((n + m - 1) // m) * m


# ----------------------------------------------------------------------------
# Kernels
# ----------------------------------------------------------------------------
def _fused_mlp_kernel(x_ref, *refs, num_layers: int):
    """Whole-MLP fusion.  refs = (w0, ..., w_{L-1}, b_packed, o_ref).

    x_ref : (tb, nInput)           f32  (cast to bf16 in-kernel)
    wi    : (din_i, dout_i_pad)    bf16 (zero-padded feature dims)
    b_pk  : (L, max_dout_pad)      f32
    o_ref : (tb, dout_last_pad)    out_dtype
    Intermediates live in vregs/VMEM only; a single store at the end.
    """
    o_ref = refs[-1]
    b_ref = refs[-2]
    w_refs = refs[:-2]

    b_all = b_ref[...]                       # (L, max_dout_pad) f32, loaded once
    h = x_ref[...].astype(jnp.bfloat16)      # in-kernel cast of streamed f32 rows
    for li in range(num_layers):
        w = w_refs[li][...]
        dout = w.shape[1]
        acc = jnp.dot(h, w, preferred_element_type=jnp.float32)   # MXU, f32 acc
        acc = acc + b_all[li:li + 1, :dout]                        # f32 bias epilogue
        if 0 < li < num_layers - 1:          # ReLU only after hidden layers
            acc = jnp.maximum(acc, 0.0)
        if li < num_layers - 1:
            h = acc.astype(jnp.bfloat16)     # bf16-native MXU for the next layer
        else:
            o_ref[...] = acc.astype(o_ref.dtype)


def _layer_kernel(x_ref, w_ref, b_ref, o_ref, *, relu: bool):
    """Single Linear (+ optional ReLU).  Used by the weight-streaming fallback."""
    h = x_ref[...].astype(jnp.bfloat16)
    acc = jnp.dot(h, w_ref[...], preferred_element_type=jnp.float32)
    acc = acc + b_ref[...]
    if relu:
        acc = jnp.maximum(acc, 0.0)
    o_ref[...] = acc.astype(o_ref.dtype)


# ----------------------------------------------------------------------------
# Parameter handling
# ----------------------------------------------------------------------------
def init_ann_params(key, n_input, n_units, n_output):
    """f32 init mimicking nn.Linear's U(-1/sqrt(fan_in), +).

    Returns [(W [in, out], b [1, out]), ...] in layer order (input, hidden...,
    output).  Weights are stored [in, out] so each layer is x @ W + b.
    """
    dims = [n_input] + list(n_units) + [n_output]
    params = []
    for i in range(len(dims) - 1):
        fan_in, fan_out = dims[i], dims[i + 1]
        key, kw, kb = jax.random.split(key, 3)
        bound = 1.0 / (fan_in ** 0.5)
        w = jax.random.uniform(kw, (fan_in, fan_out), jnp.float32, -bound, bound)
        b = jax.random.uniform(kb, (1, fan_out), jnp.float32, -bound, bound)
        params.append((w, b))
    return params


def prepare_ann_params(params):
    """bf16 weights with 128-lane-padded output widths; biases packed into one
    (num_layers, max_dout_pad) f32 array.

    Layer 0 keeps its TRUE input width so the raw (unpadded) f32 activation can
    be streamed straight from HBM.  Padded columns are zero, so padded
    activation lanes stay exactly zero through the whole network.
    """
    num_layers = len(params)
    weights = []
    for li, (w, _) in enumerate(params):
        din, dout = w.shape
        din_p = din if li == 0 else _round_up(din, LANE)
        dout_p = _round_up(dout, LANE)
        w_p = jnp.zeros((din_p, dout_p), jnp.bfloat16)
        w_p = w_p.at[:din, :dout].set(w.astype(jnp.bfloat16))
        weights.append(w_p)
    max_dout_p = max(w.shape[1] for w in weights)
    b_packed = jnp.zeros((num_layers, max_dout_p), jnp.float32)
    for li, (w, b) in enumerate(params):
        b_packed = b_packed.at[li, :w.shape[1]].set(b.reshape(-1).astype(jnp.float32))
    return weights, b_packed


# ----------------------------------------------------------------------------
# VMEM budgeting (generation-aware)
# ----------------------------------------------------------------------------
def _vmem_cap_bytes():
    """Scoped-VMEM budget with headroom for compiler scratch / spills."""
    try:
        phys = int(pltpu.get_tpu_info().vmem_capacity_bytes)
    except Exception:
        phys = 128 << 20
    if phys <= (64 << 20):
        # v7x-class: 64 MiB physical per TensorCore -> cap ~52 MiB.
        return max(phys - (12 << 20), 16 << 20)
    # v5e / v6e: 128 MiB physical -> allow up to ~100 MiB.
    return min(100 << 20, max(phys - (16 << 20), 32 << 20))


def _fused_vmem_estimate(weights, b_packed, tb, n_in_pad, weight_bufs):
    nbytes = lambda a: int(a.size) * a.dtype.itemsize
    w_bytes = sum(nbytes(w) for w in weights) * weight_bufs
    b_bytes = nbytes(b_packed) * weight_bufs
    dout_last = weights[-1].shape[1]
    max_w = max(w.shape[1] for w in weights)
    stream = 2 * tb * n_in_pad * 4 + 2 * tb * dout_last * 4   # double-buffered in/out tiles
    live = 2 * tb * max_w * (4 + 2)                           # f32 acc + bf16 h (with slack)
    return w_bytes + b_bytes + stream + live


# ----------------------------------------------------------------------------
# Forward pass
# ----------------------------------------------------------------------------
def _fused_call(x, weights, b_packed, tb, grid, dout_last_p, out_dtype, cap, n_in):
    B = x.shape[0]
    num_layers = len(weights)
    kernel = functools.partial(_fused_mlp_kernel, num_layers=num_layers)

    def build(single_buffer_weights: bool):
        wb_kw = {}
        if single_buffer_weights:
            # Constant-index blocks never change -> no need for the default double buffer.
            wb_kw = dict(pipeline_mode=pl.Buffered(1))
        in_specs = [pl.BlockSpec((tb, n_in), lambda i: (i, 0))]   # streamed f32 rows
        for w in weights:
            in_specs.append(pl.BlockSpec(w.shape, lambda i: (0, 0), **wb_kw))
        in_specs.append(pl.BlockSpec(b_packed.shape, lambda i: (0, 0), **wb_kw))
        bufs = 1 if single_buffer_weights else 2
        est = _fused_vmem_estimate(weights, b_packed, tb, _round_up(n_in, LANE), bufs)
        vmem_limit = int(min(max(2 * est, 16 << 20), cap))
        return pl.pallas_call(
            kernel,
            out_shape=jax.ShapeDtypeStruct((B, dout_last_p), out_dtype),
            grid=grid,
            in_specs=in_specs,
            out_specs=pl.BlockSpec((tb, dout_last_p), lambda i: (i, 0)),
            compiler_params=pltpu.CompilerParams(
                # Independent batch axis -> sharded across TensorCores on multi-TC chips.
                dimension_semantics=("parallel",),
                vmem_limit_bytes=vmem_limit,
            ),
        )

    try:
        return build(True)(x, *weights, b_packed)
    except Exception:
        # pipeline_mode=pl.Buffered(1) not supported by this build -> default buffering.
        return build(False)(x, *weights, b_packed)


def _layerwise_call(x, weights, b_packed, tb, out_dtype, cap):
    """Weight-streaming fallback: one layer resident at a time; bf16 activations
    round-trip HBM between layers."""
    num_layers = len(weights)
    h = x
    for li, w in enumerate(weights):
        B, din = h.shape
        dout_p = w.shape[1]
        relu = (0 < li < num_layers - 1)
        layer_dtype = jnp.bfloat16 if li < num_layers - 1 else out_dtype
        b_i = jax.lax.slice(b_packed, (li, 0), (li + 1, dout_p))
        grid = (pl.cdiv(B, tb),)
        w_bytes = int(w.size) * w.dtype.itemsize * 2 + dout_p * 4 * 2
        est = w_bytes + 2 * tb * (_round_up(din, LANE) * 4 + dout_p * 4)
        vmem_limit = int(min(max(2 * est, 16 << 20), cap))
        h = pl.pallas_call(
            functools.partial(_layer_kernel, relu=relu),
            out_shape=jax.ShapeDtypeStruct((B, dout_p), layer_dtype),
            grid=grid,
            in_specs=[pl.BlockSpec((tb, din), lambda i: (i, 0)),
                      pl.BlockSpec(w.shape, lambda i: (0, 0)),
                      pl.BlockSpec(b_i.shape, lambda i: (0, 0))],
            out_specs=pl.BlockSpec((tb, dout_p), lambda i: (i, 0)),
            compiler_params=pltpu.CompilerParams(
                dimension_semantics=("parallel",),
                vmem_limit_bytes=vmem_limit,
            ),
        )(h, w, b_i)
    return h


def ann_forward(x, prepared, n_output, *, batch_tile=512, out_dtype=jnp.float32,
                force_layerwise=False):
    """x: [B, nInput] f32 -> [B, nOutput] `out_dtype` (default f32)."""
    weights, b_packed = prepared
    B, n_in = x.shape
    assert weights[0].shape[0] == n_in
    dout_last_p = weights[-1].shape[1]
    assert dout_last_p >= n_output

    # Batch tile: large (amortizes per-step overhead, keeps the MXU fed),
    # rounded to 16 rows (bf16 sublane packing).  Last block may be partial;
    # Pallas masks its output writes.
    tb = min(_round_up(batch_tile, SUBLANE_BF16), _round_up(B, SUBLANE_BF16))
    tb = max(tb, SUBLANE_BF16)
    grid = (pl.cdiv(B, tb),)

    cap = _vmem_cap_bytes()
    est_resident = _fused_vmem_estimate(weights, b_packed, tb, _round_up(n_in, LANE), 1)
    use_fused = (not force_layerwise) and est_resident <= int(0.75 * cap)

    if use_fused:
        out_p = _fused_call(x, weights, b_packed, tb, grid, dout_last_p, out_dtype, cap, n_in)
    else:
        out_p = _layerwise_call(x, weights, b_packed, tb, out_dtype, cap)
    return out_p[:, :n_output]


# ----------------------------------------------------------------------------
# Demo / smoke test
# ----------------------------------------------------------------------------
if __name__ == "__main__":
    # Synthetic config (real cfg comes from helpers.Config().from_json('model')).
    N_INPUT = 16
    N_UNITS = [32, 32]   # input(16->32), hidden0(32->32)+ReLU, output(32->4)
    N_OUTPUT = 4
    BATCH = 40           # not a multiple of the tile -> exercises the masked last block

    key = jax.random.PRNGKey(0)
    key, kx = jax.random.split(key)
    x = jax.random.normal(kx, (BATCH, N_INPUT), jnp.float32)

    params_f32 = init_ann_params(key, N_INPUT, N_UNITS, N_OUTPUT)
    weights, b_packed = prepare_ann_params(params_f32)
    prepared = (weights, b_packed)

    # Fused path (weights VMEM-resident); small tile so the grid has >1 step.
    out = ann_forward(x, prepared, N_OUTPUT, batch_tile=16)
    out = jax.block_until_ready(out)
    assert out.shape == (BATCH, N_OUTPUT), out.shape

    # Reference 1: pure-JAX mirror of the kernel math (bf16 weights/intermediates,
    # f32 accumulation) -> tight tolerance.
    num_layers = len(weights)
    h = x.astype(jnp.bfloat16)
    for li, w_p in enumerate(weights):
        dout_p = w_p.shape[1]
        acc = jnp.dot(h, w_p, preferred_element_type=jnp.float32)
        acc = acc + b_packed[li:li + 1, :dout_p]
        if 0 < li < num_layers - 1:
            acc = jnp.maximum(acc, 0.0)
        h = acc.astype(jnp.bfloat16) if li < num_layers - 1 else acc
    ref_bf16 = h[:, :N_OUTPUT]
    assert jnp.allclose(out, ref_bf16, atol=2e-3, rtol=2e-3), "mismatch vs bf16 mirror"

    # Reference 2: full-f32 reference (original nn.Module semantics) -> loose
    # tolerance since weights/intermediates are stored in bf16.
    ref32 = x @ params_f32[0][0] + params_f32[0][1]
    for w, b in params_f32[1:-1]:
        ref32 = jnp.maximum(ref32 @ w + b, 0.0)
    ref32 = ref32 @ params_f32[-1][0] + params_f32[-1][1]
    assert jnp.allclose(out, ref32, atol=6e-2, rtol=0.0), "mismatch vs f32 reference"

    # Also exercise the weight-streaming (layer-by-layer) fallback path.
    out_lw = ann_forward(x, prepared, N_OUTPUT, batch_tile=16, force_layerwise=True)
    out_lw = jax.block_until_ready(out_lw)
    assert jnp.allclose(out, out_lw, atol=2e-3, rtol=2e-3), "fallback path mismatch"

    print("KERNEL_OK")
</pallas_src>

<mosaic_0001>
module attributes {stable_mosaic.version = 11 : i64} {
  func.func @_fused_mlp_kernel(%arg0: i32, %arg1: memref<16x16xf32, #tpu.memory_space<vmem>>, %arg2: memref<16x128xbf16, #tpu.memory_space<vmem>>, %arg3: memref<128x128xbf16, #tpu.memory_space<vmem>>, %arg4: memref<128x128xbf16, #tpu.memory_space<vmem>>, %arg5: memref<3x128xf32, #tpu.memory_space<vmem>>, %arg6: memref<16x128xf32, #tpu.memory_space<vmem>>) attributes {dimension_semantics = [#tpu.dimension_semantics<parallel>], iteration_bounds = array<i64: 3>, scalar_prefetch = 0 : i64, scratch_operands = 0 : i64, tpu.core_type = #tpu.core_type<tc>, window_params = [{transform_indices = @transform_0, window_bounds = array<i64: 16, 16>}, {pipeline_mode = #tpu.pipeline_mode<synchronous>, transform_indices = @transform_1, window_bounds = array<i64: 16, 128>}, {pipeline_mode = #tpu.pipeline_mode<synchronous>, transform_indices = @transform_2, window_bounds = array<i64: 128, 128>}, {pipeline_mode = #tpu.pipeline_mode<synchronous>, transform_indices = @transform_3, window_bounds = array<i64: 128, 128>}, {pipeline_mode = #tpu.pipeline_mode<synchronous>, transform_indices = @transform_4, window_bounds = array<i64: 3, 128>}, {transform_indices = @transform_5, window_bounds = array<i64: 16, 128>}]} {
    %c0 = arith.constant 0 : index
    %c0_0 = arith.constant 0 : index
    %0 = vector.load %arg5[%c0, %c0_0] : memref<3x128xf32, #tpu.memory_space<vmem>>, vector<3x128xf32>
    %c0_1 = arith.constant 0 : index
    %c0_2 = arith.constant 0 : index
    %1 = vector.load %arg1[%c0_1, %c0_2] : memref<16x16xf32, #tpu.memory_space<vmem>>, vector<16x16xf32>
    %2 = arith.truncf %1 : vector<16x16xf32> to vector<16x16xbf16>
    %c0_3 = arith.constant 0 : index
    %c0_4 = arith.constant 0 : index
    %3 = vector.load %arg2[%c0_3, %c0_4] : memref<16x128xbf16, #tpu.memory_space<vmem>>, vector<16x128xbf16>
    %cst = arith.constant dense<0.000000e+00> : vector<16x128xf32>
    %4 = tpu.matmul %2, %3, %cst {dimension_numbers = #tpu.dot_dimension_numbers<[1], [0], [0], [1], [0, 0, 1, 1], [], []>} : vector<16x16xbf16>, vector<16x128xbf16>, vector<16x128xf32> -> vector<16x128xf32>
    %5 = vector.extract_strided_slice %0 {offsets = [0, 0], sizes = [1, 128], strides = [1, 1]} : vector<3x128xf32> to vector<1x128xf32>
    %6 = vector.broadcast %5 : vector<1x128xf32> to vector<16x128xf32>
    %7 = arith.addf %4, %6 : vector<16x128xf32>
    %8 = arith.truncf %7 : vector<16x128xf32> to vector<16x128xbf16>
    %c0_5 = arith.constant 0 : index
    %c0_6 = arith.constant 0 : index
    %9 = vector.load %arg3[%c0_5, %c0_6] : memref<128x128xbf16, #tpu.memory_space<vmem>>, vector<128x128xbf16>
    %cst_7 = arith.constant dense<0.000000e+00> : vector<16x128xf32>
    %10 = tpu.matmul %8, %9, %cst_7 {dimension_numbers = #tpu.dot_dimension_numbers<[1], [0], [0], [1], [0, 0, 1, 1], [], []>} : vector<16x128xbf16>, vector<128x128xbf16>, vector<16x128xf32> -> vector<16x128xf32>
    %11 = vector.extract_strided_slice %0 {offsets = [1, 0], sizes = [1, 128], strides = [1, 1]} : vector<3x128xf32> to vector<1x128xf32>
    %12 = vector.broadcast %11 : vector<1x128xf32> to vector<16x128xf32>
    %13 = arith.addf %10, %12 : vector<16x128xf32>
    %cst_8 = arith.constant 0.000000e+00 : f32
    %14 = vector.broadcast %cst_8 : f32 to vector<16x128xf32>
    %15 = arith.maximumf %13, %14 : vector<16x128xf32>
    %16 = arith.truncf %15 : vector<16x128xf32> to vector<16x128xbf16>
    %c0_9 = arith.constant 0 : index
    %c0_10 = arith.constant 0 : index
    %17 = vector.load %arg4[%c0_9, %c0_10] : memref<128x128xbf16, #tpu.memory_space<vmem>>, vector<128x128xbf16>
    %cst_11 = arith.constant dense<0.000000e+00> : vector<16x128xf32>
    %18 = tpu.matmul %16, %17, %cst_11 {dimension_numbers = #tpu.dot_dimension_numbers<[1], [0], [0], [1], [0, 0, 1, 1], [], []>} : vector<16x128xbf16>, vector<128x128xbf16>, vector<16x128xf32> -> vector<16x128xf32>
    %19 = vector.extract_strided_slice %0 {offsets = [2, 0], sizes = [1, 128], strides = [1, 1]} : vector<3x128xf32> to vector<1x128xf32>
    %20 = vector.broadcast %19 : vector<1x128xf32> to vector<16x128xf32>
    %21 = arith.addf %18, %20 : vector<16x128xf32>
    %c0_12 = arith.constant 0 : index
    %c0_13 = arith.constant 0 : index
    %22 = vector.load %arg6[%c0_12, %c0_13] : memref<16x128xf32, #tpu.memory_space<vmem>>, vector<16x128xf32>
    tpu.vector_store %arg6[%c0_12, %c0_13], %21 {strides = array<i32>} : memref<16x128xf32, #tpu.memory_space<vmem>>, vector<16x128xf32>,
    return
  }
  func.func @transform_0(%arg0: i32) -> (i32, i32) {
    %c0_i32 = arith.constant 0 : i32
    %c0_i32_0 = arith.constant 0 : i32
    return %arg0, %c0_i32 : i32, i32
  }
  func.func @transform_1(%arg0: i32) -> (i32, i32) {
    %c0_i32 = arith.constant 0 : i32
    %c0_i32_0 = arith.constant 0 : i32
    %c0_i32_1 = arith.constant 0 : i32
    return %c0_i32, %c0_i32_0 : i32, i32
  }
  func.func @transform_2(%arg0: i32) -> (i32, i32) {
    %c0_i32 = arith.constant 0 : i32
    %c0_i32_0 = arith.constant 0 : i32
    %c0_i32_1 = arith.constant 0 : i32
    return %c0_i32, %c0_i32_0 : i32, i32
  }
  func.func @transform_3(%arg0: i32) -> (i32, i32) {
    %c0_i32 = arith.constant 0 : i32
    %c0_i32_0 = arith.constant 0 : i32
    %c0_i32_1 = arith.constant 0 : i32
    return %c0_i32, %c0_i32_0 : i32, i32
  }
  func.func @transform_4(%arg0: i32) -> (i32, i32) {
    %c0_i32 = arith.constant 0 : i32
    %c0_i32_0 = arith.constant 0 : i32
    %c0_i32_1 = arith.constant 0 : i32
    return %c0_i32, %c0_i32_0 : i32, i32
  }
  func.func @transform_5(%arg0: i32) -> (i32, i32) {
    %c0_i32 = arith.constant 0 : i32
    %c0_i32_0 = arith.constant 0 : i32
    return %arg0, %c0_i32 : i32, i32
  }
}

module attributes {stable_mosaic.version = 11 : i64} {
  func.func @_fused_mlp_kernel(%arg0: i32, %arg1: memref<16x16xf32, #tpu.memory_space<vmem>>, %arg2: memref<16x128xbf16, #tpu.memory_space<vmem>>, %arg3: memref<128x128xbf16, #tpu.memory_space<vmem>>, %arg4: memref<128x128xbf16, #tpu.memory_space<vmem>>, %arg5: memref<3x128xf32, #tpu.memory_space<vmem>>, %arg6: memref<16x128xf32, #tpu.memory_space<vmem>>) attributes {dimension_semantics = [#tpu.dimension_semantics<parallel>], iteration_bounds = array<i64: 3>, scalar_prefetch = 0 : i64, scratch_operands = 0 : i64, tpu.core_type = #tpu.core_type<tc>, window_params = [{transform_indices = @transform_0, window_bounds = array<i64: 16, 16>}, {pipeline_mode = #tpu.pipeline_mode<synchronous>, transform_indices = @transform_1, window_bounds = array<i64: 16, 128>}, {pipeline_mode = #tpu.pipeline_mode<synchronous>, transform_indices = @transform_2, window_bounds = array<i64: 128, 128>}, {pipeline_mode = #tpu.pipeline_mode<synchronous>, transform_indices = @transform_3, window_bounds = array<i64: 128, 128>}, {pipeline_mode = #tpu.pipeline_mode<synchronous>, transform_indices = @transform_4, window_bounds = array<i64: 3, 128>}, {transform_indices = @transform_5, window_bounds = array<i64: 16, 128>}]} {
    %c0 = arith.constant 0 : index
    %c0_0 = arith.constant 0 : index
    %0 = vector.load %arg5[%c0, %c0_0] : memref<3x128xf32, #tpu.memory_space<vmem>>, vector<3x128xf32>
    %c0_1 = arith.constant 0 : index
    %c0_2 = arith.constant 0 : index
    %1 = vector.load %arg1[%c0_1, %c0_2] : memref<16x16xf32, #tpu.memory_space<vmem>>, vector<16x16xf32>
    %2 = arith.truncf %1 : vector<16x16xf32> to vector<16x16xbf16>
    %c0_3 = arith.constant 0 : index
    %c0_4 = arith.constant 0 : index
    %3 = vector.load %arg2[%c0_3, %c0_4] : memref<16x128xbf16, #tpu.memory_space<vmem>>, vector<16x128xbf16>
    %cst = arith.constant dense<0.000000e+00> : vector<16x128xf32>
    %4 = tpu.matmul %2, %3, %cst {dimension_numbers = #tpu.dot_dimension_numbers<[1], [0], [0], [1], [0, 0, 1, 1], [], []>} : vector<16x16xbf16>, vector<16x128xbf16>, vector<16x128xf32> -> vector<16x128xf32>
    %5 = vector.extract_strided_slice %0 {offsets = [0, 0], sizes = [1, 128], strides = [1, 1]} : vector<3x128xf32> to vector<1x128xf32>
    %6 = vector.broadcast %5 : vector<1x128xf32> to vector<16x128xf32>
    %7 = arith.addf %4, %6 : vector<16x128xf32>
    %8 = arith.truncf %7 : vector<16x128xf32> to vector<16x128xbf16>
    %c0_5 = arith.constant 0 : index
    %c0_6 = arith.constant 0 : index
    %9 = vector.load %arg3[%c0_5, %c0_6] : memref<128x128xbf16, #tpu.memory_space<vmem>>, vector<128x128xbf16>
    %cst_7 = arith.constant dense<0.000000e+00> : vector<16x128xf32>
    %10 = tpu.matmul %8, %9, %cst_7 {dimension_numbers = #tpu.dot_dimension_numbers<[1], [0], [0], [1], [0, 0, 1, 1], [], []>} : vector<16x128xbf16>, vector<128x128xbf16>, vector<16x128xf32> -> vector<16x128xf32>
    %11 = vector.extract_strided_slice %0 {offsets = [1, 0], sizes = [1, 128], strides = [1, 1]} : vector<3x128xf32> to vector<1x128xf32>
    %12 = vector.broadcast %11 : vector<1x128xf32> to vector<16x128xf32>
    %13 = arith.addf %10, %12 : vector<16x128xf32>
    %cst_8 = arith.constant 0.000000e+00 : f32
    %14 = vector.broadcast %cst_8 : f32 to vector<16x128xf32>
    %15 = arith.maximumf %13, %14 : vector<16x128xf32>
    %16 = arith.truncf %15 : vector<16x128xf32> to vector<16x128xbf16>
    %c0_9 = arith.constant 0 : index
    %c0_10 = arith.constant 0 : index
    %17 = vector.load %arg4[%c0_9, %c0_10] : memref<128x128xbf16, #tpu.memory_space<vmem>>, vector<128x128xbf16>
    %cst_11 = arith.constant dense<0.000000e+00> : vector<16x128xf32>
    %18 = tpu.matmul %16, %17, %cst_11 {dimension_numbers = #tpu.dot_dimension_numbers<[1], [0], [0], [1], [0, 0, 1, 1], [], []>} : vector<16x128xbf16>, vector<128x128xbf16>, vector<16x128xf32> -> vector<16x128xf32>
    %19 = vector.extract_strided_slice %0 {offsets = [2, 0], sizes = [1, 128], strides = [1, 1]} : vector<3x128xf32> to vector<1x128xf32>
    %20 = vector.broadcast %19 : vector<1x128xf32> to vector<16x128xf32>
    %21 = arith.addf %18, %20 : vector<16x128xf32>
    %c0_12 = arith.constant 0 : index
    %c0_13 = arith.constant 0 : index
    %22 = vector.load %arg6[%c0_12, %c0_13] : memref<16x128xf32, #tpu.memory_space<vmem>>, vector<16x128xf32>
    tpu.vector_store %arg6[%c0_12, %c0_13], %21 {strides = array<i32>} : memref<16x128xf32, #tpu.memory_space<vmem>>, vector<16x128xf32>,
    return
  }
  func.func @transform_0(%arg0: i32) -> (i32, i32) {
    %c0_i32 = arith.constant 0 : i32
    %c0_i32_0 = arith.constant 0 : i32
    return %arg0, %c0_i32 : i32, i32
  }
  func.func @transform_1(%arg0: i32) -> (i32, i32) {
    %c0_i32 = arith.constant 0 : i32
    %c0_i32_0 = arith.constant 0 : i32
    %c0_i32_1 = arith.constant 0 : i32
    return %c0_i32, %c0_i32_0 : i32, i32
  }
  func.func @transform_2(%arg0: i32) -> (i32, i32) {
    %c0_i32 = arith.constant 0 : i32
    %c0_i32_0 = arith.constant 0 : i32
    %c0_i32_1 = arith.constant 0 : i32
    return %c0_i32, %c0_i32_0 : i32, i32
  }
  func.func @transform_3(%arg0: i32) -> (i32, i32) {
    %c0_i32 = arith.constant 0 : i32
    %c0_i32_0 = arith.constant 0 : i32
    %c0_i32_1 = arith.constant 0 : i32
    return %c0_i32, %c0_i32_0 : i32, i32
  }
  func.func @transform_4(%arg0: i32) -> (i32, i32) {
    %c0_i32 = arith.constant 0 : i32
    %c0_i32_0 = arith.constant 0 : i32
    %c0_i32_1 = arith.constant 0 : i32
    return %c0_i32, %c0_i32_0 : i32, i32
  }
  func.func @transform_5(%arg0: i32) -> (i32, i32) {
    %c0_i32 = arith.constant 0 : i32
    %c0_i32_0 = arith.constant 0 : i32
    return %arg0, %c0_i32 : i32, i32
  }
}

</mosaic_0001>

<llo_original>
// kernel: tpu_custom_call.1
$region0: #{tpu_custom_call.1}
  #allocation0 [shape = 'u32[]', space=smem, size = 0x4, offset = 0x4, fixed_abs, tag = 'smem constant byte address 0x4 - core index']
  #allocation1 [shape = 'u32[144,128]{1,0:T(1,128)}', space=vmem, size = 0x12000, scoped, tag = 'internal scratch']
  %s0 = inlined_call_operand.vmem [shape: f32[40,16], index: 0, kind: input, shape index: {}]
  %s1 = inlined_call_operand.hbm [shape: bf16[16,128], index: 1, kind: input, shape index: {}]
  %s2 = inlined_call_operand.hbm [shape: bf16[128,128], index: 2, kind: input, shape index: {}]
  %s3 = inlined_call_operand.vmem [shape: bf16[128,128], index: 3, kind: input, shape index: {}]
  %s4 = inlined_call_operand.vmem [shape: f32[3,128], index: 4, kind: input, shape index: {}]
  %s5 = inlined_call_operand.hbm [shape: f32[40,128], index: 5, kind: output, shape index: {}]
  %s6 = sld [smem:[#allocation0]]
  $region61: #{tpu_custom_call.1} parent=0
    _
  %s8 = ssub.s32 1, %s6
  %s9 = scalar_select 0, %s8, %s6
  $region1: #{tpu_custom_call.1} parent=0
    #allocation2 [shape = 'u8[4096]{0}', space=vmem, size = 0x1000, scoped, tag = 'input window, operand 1, single buffered']
    #allocation3 [shape = 's32[2]{0}', space=sflag, size = 0x8, scoped, tag = 'scoped memory for tpu_custom_call.1']
    #allocation4 [shape = 's32[2]{0}', space=sflag, size = 0x8, scoped, tag = 'scoped memory for tpu_custom_call.1']
    #allocation5 [shape = 'u8[32768]{0}', space=vmem, size = 0x8000, scoped, tag = 'input window, operand 2, single buffered']
    #allocation6 [shape = 's32[1]{0}', space=sflag, size = 0x4, scoped, tag = 'scoped memory for tpu_custom_call.1']
    #allocation7 [shape = 'u8[16384]{0}', space=vmem, size = 0x4000, scoped, tag = 'output window, operand 0']
    %10 = vsyncpa [#allocation3], 0
    %11 = vsyncpa [#allocation6], 0
    %12 = vsyncpa [#allocation4], 0
    %s13 = scalar_lea.sflag [#allocation4], 1
    %14 = vsyncpa %s13, 0
    loop: start=0, step=1, limit=5
    $region2: #{tpu_custom_call.1} parent=1 // loop_pre_header
      _
    $region3: #{tpu_custom_call.1} parent=1 // loop_header
      %s16 = sphi 0, %s20
      %p17 = scmp.ge.s32.totalorder %s16, 5
      %s26 = sphi 0, %s28
      %s29 = sphi 0, %s26
      %s30 = sphi 0, %s29
      %s46 = sphi 0, %s30
      %s50 = sphi 0, %s50
      %s52 = sphi 0, %s50
      %s53 = sphi 0, %s52
      %s67 = sphi 0, %s53
      %s71 = sphi 0, %s71
      %s73 = sphi 0, %s71
      %s74 = sphi 0, %s73
      %s88 = sphi 0, %s74
      %s92 = sphi 0, %s92
      %s94 = sphi 0, %s92
      %s95 = sphi 0, %s94
      %s109 = sphi 0, %s95
      %s113 = sphi 0, %s113
      %s115 = sphi 0, %s113
      %s116 = sphi 0, %s115
      %s130 = sphi 0, %s116
      %s136 = sphi 0, %s138
      %s139 = sphi 0, %s136
      %s140 = sphi 0, %s139
      %s156 = sphi 0, %s140
    $region4: #{tpu_custom_call.1} parent=1 // loop_header_branch
      %19 = sbr.rel (%p17) target = $region8
    $region5: #{tpu_custom_call.1} parent=1 // loop_body
      %s21 = ssub.s32 %s16, 1
      %s22 = ssub.s32 %s16, 2
      %s23 = sadd.s32 %s16, 1
      %s24 = ssub.s32 %s16, %s23
      %p25 = scmp.eq.s32.totalorder %s24, 0
      %s27 = sadd.s32 %s26, 1
      %s28 = scalar_select %p25, %s26, %s27
      %p31 = pneg %p25
      %p32 = scmp.eq.s32.totalorder %s16, 2
      %p33 = por %p31, %p32
      %p34 = scmp.ne.s32.totalorder %s26, %s29
      %p35 = scmp.eq.s32.totalorder %s16, 0
      %p36 = por %p34, %p35
      %p37 = scmp.ne.s32.totalorder %s26, %s29
      %p38 = scmp.eq.s32.totalorder %s21, 2
      %p39 = por %p37, %p38
      %p40 = scmp.ne.s32.totalorder %s29, %s30
      %p41 = scmp.eq.s32.totalorder %s21, 0
      %p42 = por %p40, %p41
      %p43 = scmp.ne.s32.totalorder %s29, %s30
      %p44 = scmp.eq.s32.totalorder %s22, 2
      %p45 = por %p43, %p44
      %p47 = scmp.ne.s32.totalorder %s30, %s46
      %p48 = scmp.eq.s32.totalorder %s22, 0
      %p49 = por %p47, %p48
      %s51 = sadd.s32 %s50, 1
      %p54 = scmp.eq.s32.totalorder %s16, 2
      %p55 = scmp.ne.s32.totalorder %s50, %s52
      %p56 = scmp.eq.s32.totalorder %s16, 0
      %p57 = por %p55, %p56
      %p58 = scmp.ne.s32.totalorder %s50, %s52
      %p59 = scmp.eq.s32.totalorder %s21, 2
      %p60 = por %p58, %p59
      %p61 = scmp.ne.s32.totalorder %s52, %s53
      %p62 = scmp.eq.s32.totalorder %s21, 0
      %p63 = por %p61, %p62
      %p64 = scmp.ne.s32.totalorder %s52, %s53
      %p65 = scmp.eq.s32.totalorder %s22, 2
      %p66 = por %p64, %p65
      %p68 = scmp.ne.s32.totalorder %s53, %s67
      %p69 = scmp.eq.s32.totalorder %s22, 0
      %p70 = por %p68, %p69
      %s72 = sadd.s32 %s71, 1
      %p75 = scmp.eq.s32.totalorder %s16, 2
      %p76 = scmp.ne.s32.totalorder %s71, %s73
      %p77 = scmp.eq.s32.totalorder %s16, 0
      %p78 = por %p76, %p77
      %p79 = scmp.ne.s32.totalorder %s71, %s73
      %p80 = scmp.eq.s32.totalorder %s21, 2
      %p81 = por %p79, %p80
      %p82 = scmp.ne.s32.totalorder %s73, %s74
      %p83 = scmp.eq.s32.totalorder %s21, 0
      %p84 = por %p82, %p83
      %p85 = scmp.ne.s32.totalorder %s73, %s74
      %p86 = scmp.eq.s32.totalorder %s22, 2
      %p87 = por %p85, %p86
      %p89 = scmp.ne.s32.totalorder %s74, %s88
      %p90 = scmp.eq.s32.totalorder %s22, 0
      %p91 = por %p89, %p90
      %s93 = sadd.s32 %s92, 1
      %p96 = scmp.eq.s32.totalorder %s16, 2
      %p97 = scmp.ne.s32.totalorder %s92, %s94
      %p98 = scmp.eq.s32.totalorder %s16, 0
      %p99 = por %p97, %p98
      %p100 = scmp.ne.s32.totalorder %s92, %s94
      %p101 = scmp.eq.s32.totalorder %s21, 2
      %p102 = por %p100, %p101
      %p103 = scmp.ne.s32.totalorder %s94, %s95
      %p104 = scmp.eq.s32.totalorder %s21, 0
      %p105 = por %p103, %p104
      %p106 = scmp.ne.s32.totalorder %s94, %s95
      %p107 = scmp.eq.s32.totalorder %s22, 2
      %p108 = por %p106, %p107
      %p110 = scmp.ne.s32.totalorder %s95, %s109
      %p111 = scmp.eq.s32.totalorder %s22, 0
      %p112 = por %p110, %p111
      %s114 = sadd.s32 %s113, 1
      %p117 = scmp.eq.s32.totalorder %s16, 2
      %p118 = scmp.ne.s32.totalorder %s113, %s115
      %p119 = scmp.eq.s32.totalorder %s16, 0
      %p120 = por %p118, %p119
      %p121 = scmp.ne.s32.totalorder %s113, %s115
      %p122 = scmp.eq.s32.totalorder %s21, 2
      %p123 = por %p121, %p122
      %p124 = scmp.ne.s32.totalorder %s115, %s116
      %p125 = scmp.eq.s32.totalorder %s21, 0
      %p126 = por %p124, %p125
      %p127 = scmp.ne.s32.totalorder %s115, %s116
      %p128 = scmp.eq.s32.totalorder %s22, 2
      %p129 = por %p127, %p128
      %p131 = scmp.ne.s32.totalorder %s116, %s130
      %p132 = scmp.eq.s32.totalorder %s22, 0
      %p133 = por %p131, %p132
      %s134 = ssub.s32 %s16, %s23
      %p135 = scmp.eq.s32.totalorder %s134, 0
      %s137 = sadd.s32 %s136, 1
      %s138 = scalar_select %p135, %s136, %s137
      %p141 = pneg %p135
      %p142 = scmp.eq.s32.totalorder %s16, 2
      %p143 = por %p141, %p142
      %p144 = scmp.ne.s32.totalorder %s136, %s139
      %p145 = scmp.eq.s32.totalorder %s16, 0
      %p146 = por %p144, %p145
      %p147 = scmp.ne.s32.totalorder %s136, %s139
      %p148 = scmp.eq.s32.totalorder %s21, 2
      %p149 = por %p147, %p148
      %p150 = scmp.ne.s32.totalorder %s139, %s140
      %p151 = scmp.eq.s32.totalorder %s21, 0
      %p152 = por %p150, %p151
      %p153 = scmp.ne.s32.totalorder %s139, %s140
      %p154 = scmp.eq.s32.totalorder %s22, 2
      %p155 = por %p153, %p154
      %p157 = scmp.ne.s32.totalorder %s140, %s156
      %p158 = scmp.eq.s32.totalorder %s22, 0
      %p159 = por %p157, %p158
      %p160 = scmp.le.s32.totalorder 1, %s16
      %p161 = scmp.lt.s32.totalorder %s16, 4
      %p162 = pnand %p160, %p161
      %p163 = pneg %p162
      // Predicated region
      $region9: #{tpu_custom_call.1} parent=5 // pred_check
        _
      $region10: #{tpu_custom_call.1} parent=5 // pred_check_branch
        %165 = sbr.rel (%p162) target = $region12
      $region11: #{tpu_custom_call.1} parent=5 // pred_region
        %s166 = ssub.s32 %s16, 1
        // Predicated region
        $region13: #{tpu_custom_call.1} parent=11 // pred_check
          %p167 = pneg %p63
        $region14: #{tpu_custom_call.1} parent=11 // pred_check_branch
          %169 = sbr.rel (%p167) target = $region16
        $region15: #{tpu_custom_call.1} parent=11 // pred_region
          %s171 = ssub.s32 128, 128
          %172 = vsyncadd [#allocation3], %s171
          %s173 = sshll.u32 [#allocation2], 4
          %s174 = int_to_ptr.vmem [resolvable:$true] %s173
          %179 = dma.hbm_to_vmem [thread:$0]  %s1, 128, %s174, [#allocation3], 64, 64, 4
        $region16: #{tpu_custom_call.1} parent=11 // pred_fallthru
          _
        // Predicated region
        $region17: #{tpu_custom_call.1} parent=11 // pred_check
          %p180 = pneg %p84
        $region18: #{tpu_custom_call.1} parent=11 // pred_check_branch
          %182 = sbr.rel (%p180) target = $region20
        $region19: #{tpu_custom_call.1} parent=11 // pred_region
          %s184 = ssub.s32 1024, 1024
          %185 = vsyncadd [#allocation6], %s184
          %s186 = sshll.u32 [#allocation5], 4
          %s187 = int_to_ptr.vmem [resolvable:$true] %s186
          %192 = dma.hbm_to_vmem [thread:$0]  %s2, 1024, %s187, [#allocation6], 64, 64, 4
        $region20: #{tpu_custom_call.1} parent=11 // pred_fallthru
          _
        // Predicated region
        $region21: #{tpu_custom_call.1} parent=11 // pred_check
          %p193 = pneg %p105
        $region22: #{tpu_custom_call.1} parent=11 // pred_check_branch
          %195 = sbr.rel (%p193) target = $region24
        $region23: #{tpu_custom_call.1} parent=11 // pred_region
          _
        $region24: #{tpu_custom_call.1} parent=11 // pred_fallthru
          _
        // Predicated region
        $region25: #{tpu_custom_call.1} parent=11 // pred_check
          %p196 = pneg %p126
        $region26: #{tpu_custom_call.1} parent=11 // pred_check_branch
          %198 = sbr.rel (%p196) target = $region28
        $region27: #{tpu_custom_call.1} parent=11 // pred_region
          _
        $region28: #{tpu_custom_call.1} parent=11 // pred_fallthru
          _
      $region12: #{tpu_custom_call.1} parent=5 // pred_fallthru
        _
      %p199 = scmp.lt.s32.totalorder %s16, 3
      // Predicated region
      $region29: #{tpu_custom_call.1} parent=5 // pred_check
        %p200 = pneg %p199
      $region30: #{tpu_custom_call.1} parent=5 // pred_check_branch
        %202 = sbr.rel (%p200) target = $region32
      $region31: #{tpu_custom_call.1} parent=5 // pred_region
        // Predicated region
        $region33: #{tpu_custom_call.1} parent=31 // pred_check
          %p203 = pneg %p36
        $region34: #{tpu_custom_call.1} parent=31 // pred_check_branch
          %205 = sbr.rel (%p203) target = $region36
        $region35: #{tpu_custom_call.1} parent=31 // pred_region
          %s206 = smul.u32 2, %s16
          %s207 = ssub.s32 5, %s206
          %p208 = scmp.lt.s32.totalorder %s207, 2
          %s209 = scalar_select %p208, %s207, 2
          %s210 = smul.u32 128, %s209
          %p211 = scmp.lt.s32.totalorder %s206, 4
          %s212 = scalar_select %p211, %s206, 4
          %s213 = smul.addr %s212, 8
          %s214 = scalar_lea.vmem %s0, %s213
          %s215 = smul.u32 2, %s16
          %s216 = ssub.s32 5, %s215
          %p217 = scmp.lt.s32.totalorder %s216, 2
          %s218 = scalar_select %p217, %s216, 2
          %s219 = smul.u32 128, %s218
        $region36: #{tpu_custom_call.1} parent=31 // pred_fallthru
          _
      $region32: #{tpu_custom_call.1} parent=5 // pred_fallthru
        _
      %p220 = scmp.le.s32.totalorder 1, %s16
      %p221 = scmp.lt.s32.totalorder %s16, 4
      %p222 = pnand %p220, %p221
      %p223 = pneg %p222
      // Predicated region
      $region37: #{tpu_custom_call.1} parent=5 // pred_check
        _
      $region38: #{tpu_custom_call.1} parent=5 // pred_check_branch
        %225 = sbr.rel (%p222) target = $region40
      $region39: #{tpu_custom_call.1} parent=5 // pred_region
        %s226 = ssub.s32 %s16, 1
        // Predicated region
        $region41: #{tpu_custom_call.1} parent=39 // pred_check
          %p227 = pneg %p63
        $region42: #{tpu_custom_call.1} parent=39 // pred_check_branch
          %229 = sbr.rel (%p227) target = $region44
        $region43: #{tpu_custom_call.1} parent=39 // pred_region
          %230 = dma.done [#allocation3], 128
        $region44: #{tpu_custom_call.1} parent=39 // pred_fallthru
          _
        // Predicated region
        $region45: #{tpu_custom_call.1} parent=39 // pred_check
          %p231 = pneg %p84
        $region46: #{tpu_custom_call.1} parent=39 // pred_check_branch
          %233 = sbr.rel (%p231) target = $region48
        $region47: #{tpu_custom_call.1} parent=39 // pred_region
          %234 = dma.done [#allocation6], 1024
        $region48: #{tpu_custom_call.1} parent=39 // pred_fallthru
          _
        %s235 = smul.u32 2, %s21
        %s236 = ssub.s32 5, %s235
        %p237 = scmp.lt.s32.totalorder %s236, 2
        %s238 = scalar_select %p237, %s236, 2
        %s239 = smul.u32 128, %s238
        %p240 = scmp.lt.s32.totalorder %s235, 4
        %s241 = scalar_select %p240, %s235, 4
        %s242 = smul.addr %s241, 8
        %s243 = scalar_lea.vmem %s0, %s242
        %p244 = pneg %p42
        %p245 = pneg %p39
        %p246 = pneg %p63
        %p247 = pneg %p60
        %p248 = pneg %p84
        %p249 = pneg %p81
        %p250 = pneg %p105
        %p251 = pneg %p102
        %p252 = pneg %p126
        %p253 = pneg %p123
        %p254 = pneg %p152
        %p255 = pneg %p149
        %s256 = sand.u32 %s139, 1
        %s257 = scalar_lea.sflag [#allocation4], %s256
        %s258 = sand.u32 %s139, 1
        %s259 = smul.addr %s258, 16
        %s260 = scalar_lea.vmem [#allocation7], %s259
        %s261 = smul.u32 2, %s21
        %s262 = ssub.s32 5, %s261
        %p263 = scmp.lt.s32.totalorder %s262, 2
        %s264 = scalar_select %p263, %s262, 2
        %s265 = smul.u32 128, %s264
        %p266 = scmp.lt.s32.totalorder %s261, 4
        %s267 = scalar_select %p266, %s261, 4
        %s268 = smul.addr %s267, 8
        %s269 = scalar_lea.vmem %s0, %s268
        %s270 = smul.u32 2, %s21
        %s271 = ssub.s32 5, %s270
        %p272 = scmp.lt.s32.totalorder %s271, 2
        %s273 = scalar_select %p272, %s271, 2
        %s274 = smul.u32 128, %s273
        %s275 = smul.u32 2, %s21
        %s276 = ssub.s32 5, %s275
        %p277 = scmp.lt.s32.totalorder %s276, 2
        %s278 = scalar_select %p277, %s276, 2
        %s279 = smul.u32 128, %s278
        %v281 = vld [vmem:[%s4] sm:$0x7]
        %v282 = vld [vmem:[%s269] sm:$0xff]
        %v283 = vld [vmem:[%s269 + $0x8] sm:$0xff]
        %v284 = vpack.c.bf16 %v283, %v282
        %v285 = vld [vmem:[#allocation2] sm:$0xf]
        %v286 = vld [vmem:[#allocation2 + $0x4] sm:$0xf]
        %v287 = vlaneseq
        %v288 = vshrl.u32 %v287, 7
        %v289 = vsub.s32 0, %v288
        %v290 = vrot.slane %v281, %v289
        %v293 = vunpack.c.l.b16 %v285
        %v294 = vunpack.c.l.b16 %v286
        %v295 = vpack.c.b16 %v294, %v293
        %vm297 = vcmask 130048
        %v299 = vsel %vm297, %v284, 0
        %301 = vmatprep.subr.bf16.mxu0 0
        %302 = vmatpush1.bf16.msra.mxu0 %v295
        %303 = vmatprep.subr.bf16.mxu0 0
        %304 = vmatpush1.bf16.msra.mxu0 0
        %305 = vmatprep.subr.bf16.mxu0 0
        %306 = vmatpush1.bf16.msra.mxu0 0
        %307 = vmatprep.subr.bf16.mxu0 0
        %308 = vmatpush1.bf16.msra.mxu0 0
        %309 = vmatprep.subr.bf16.mxu0 0
        %310 = vmatpush1.bf16.msra.mxu0 0
        %311 = vmatprep.subr.bf16.mxu0 0
        %312 = vmatpush1.bf16.msra.mxu0 0
        %313 = vmatprep.subr.bf16.mxu0 0
        %314 = vmatpush1.bf16.msra.mxu0 0
        %315 = vmatprep.subr.bf16.mxu0 0
        %316 = vmatpush1.bf16.msra.mxu0 0
        %317 = vmatprep.subr.bf16.mxu0 0
        %318 = vmatpush1.bf16.msra.mxu0 0
        %319 = vmatprep.subr.bf16.mxu0 0
        %320 = vmatpush1.bf16.msra.mxu0 0
        %321 = vmatprep.subr.bf16.mxu0 0
        %322 = vmatpush1.bf16.msra.mxu0 0
        %323 = vmatprep.subr.bf16.mxu0 0
        %324 = vmatpush1.bf16.msra.mxu0 0
        %325 = vmatprep.subr.bf16.mxu0 0
        %326 = vmatpush1.bf16.msra.mxu0 0
        %327 = vmatprep.subr.bf16.mxu0 0
        %328 = vmatpush1.bf16.msra.mxu0 0
        %329 = vmatprep.subr.bf16.mxu0 0
        %330 = vmatpush1.bf16.msra.mxu0 0
        %331 = vmatprep.subr.bf16.mxu0 0
        %332 = vmatpush1.bf16.msra.mxu0 0
        %333 = vmatprep.mubr.bf16.mxu0 0
        %334 = vmatmul.mubr.bf16.gmra.mrb[0].mxu0 %v299
        %v335 = vpop.f32.mrb[0].mxu0
        %v336 = vadd.f32 %v290, %v335
        %v337 = vpop.f32.mrb[0].mxu0
        %v338 = vpop.f32.mrb[0].mxu0
        %v339 = vadd.f32 %v290, %v338
        %v340 = vpop.f32.mrb[0].mxu0
        %341 = vdwg.mxu0
        %v342 = vpack.c.bf16 %v339, %v336
        %v343 = vld [vmem:[#allocation5] sm:$0xf]
        %v344 = vld [vmem:[#allocation5 + $0x4] sm:$0xf]
        %v345 = vld [vmem:[#allocation5 + $0x8] sm:$0xf]
        %v346 = vld [vmem:[#allocation5 + $0xc] sm:$0xf]
        %v347 = vld [vmem:[#allocation5 + $0x10] sm:$0xf]
        %v348 = vld [vmem:[#allocation5 + $0x14] sm:$0xf]
        %v349 = vld [vmem:[#allocation5 + $0x18] sm:$0xf]
        %v350 = vld [vmem:[#allocation5 + $0x1c] sm:$0xf]
        %v351 = vld [vmem:[#allocation5 + $0x20] sm:$0xf]
        %v352 = vld [vmem:[#allocation5 + $0x24] sm:$0xf]
        %v353 = vld [vmem:[#allocation5 + $0x28] sm:$0xf]
        %v354 = vld [vmem:[#allocation5 + $0x2c] sm:$0xf]
        %v355 = vld [vmem:[#allocation5 + $0x30] sm:$0xf]
        %v356 = vld [vmem:[#allocation5 + $0x34] sm:$0xf]
        %v357 = vld [vmem:[#allocation5 + $0x38] sm:$0xf]
        %v358 = vld [vmem:[#allocation5 + $0x3c] sm:$0xf]
        %v359 = vlaneseq
        %v360 = vshrl.u32 %v359, 7
        %v361 = vsub.s32 1, %v360
        %v362 = vrot.slane %v281, %v361
        %v379 = vunpack.c.l.b16 %v343
        %v380 = vunpack.c.l.b16 %v344
        %v381 = vunpack.c.l.b16 %v345
        %v382 = vunpack.c.l.b16 %v346
        %v383 = vunpack.c.l.b16 %v347
        %v384 = vunpack.c.l.b16 %v348
        %v385 = vunpack.c.l.b16 %v349
        %v386 = vunpack.c.l.b16 %v350
        %v387 = vunpack.c.l.b16 %v351
        %v388 = vunpack.c.l.b16 %v352
        %v389 = vunpack.c.l.b16 %v353
        %v390 = vunpack.c.l.b16 %v354
        %v391 = vunpack.c.l.b16 %v355
        %v392 = vunpack.c.l.b16 %v356
        %v393 = vunpack.c.l.b16 %v357
        %v394 = vunpack.c.l.b16 %v358
        %v395 = vpack.c.b16 %v380, %v379
        %v396 = vpack.c.b16 %v382, %v381
        %v397 = vpack.c.b16 %v384, %v383
        %v398 = vpack.c.b16 %v386, %v385
        %v399 = vpack.c.b16 %v388, %v387
        %v400 = vpack.c.b16 %v390, %v389
        %v401 = vpack.c.b16 %v392, %v391
        %v402 = vpack.c.b16 %v394, %v393
        %411 = vmatprep.subr.bf16.mxu0 0
        %412 = vmatpush1.bf16.msra.mxu0 %v395
        %413 = vmatprep.subr.bf16.mxu0 0
        %414 = vmatpush1.bf16.msra.mxu0 %v396
        %415 = vmatprep.subr.bf16.mxu0 0
        %416 = vmatpush1.bf16.msra.mxu0 %v397
        %417 = vmatprep.subr.bf16.mxu0 0
        %418 = vmatpush1.bf16.msra.mxu0 %v398
        %419 = vmatprep.subr.bf16.mxu0 0
        %420 = vmatpush1.bf16.msra.mxu0 %v399
        %421 = vmatprep.subr.bf16.mxu0 0
        %422 = vmatpush1.bf16.msra.mxu0 %v400
        %423 = vmatprep.subr.bf16.mxu0 0
        %424 = vmatpush1.bf16.msra.mxu0 %v401
        %425 = vmatprep.subr.bf16.mxu0 0
        %426 = vmatpush1.bf16.msra.mxu0 %v402
        %427 = vmatprep.subr.bf16.mxu0 0
        %428 = vmatpush1.bf16.msra.mxu0 0
        %429 = vmatprep.subr.bf16.mxu0 0
        %430 = vmatpush1.bf16.msra.mxu0 0
        %431 = vmatprep.subr.bf16.mxu0 0
        %432 = vmatpush1.bf16.msra.mxu0 0
        %433 = vmatprep.subr.bf16.mxu0 0
        %434 = vmatpush1.bf16.msra.mxu0 0
        %435 = vmatprep.subr.bf16.mxu0 0
        %436 = vmatpush1.bf16.msra.mxu0 0
        %437 = vmatprep.subr.bf16.mxu0 0
        %438 = vmatpush1.bf16.msra.mxu0 0
        %439 = vmatprep.subr.bf16.mxu0 0
        %440 = vmatpush1.bf16.msra.mxu0 0
        %441 = vmatprep.subr.bf16.mxu0 0
        %442 = vmatpush1.bf16.msra.mxu0 0
        %443 = vmatprep.mubr.bf16.mxu0 0
        %444 = vmatmul.mubr.bf16.gmra.mrb[0].mxu0 %v342
        %v445 = vpop.f32.mrb[0].mxu0
        %v446 = vadd.f32 %v362, %v445
        %v447 = vpop.f32.mrb[0].mxu0
        %v448 = vpop.f32.mrb[0].mxu0
        %v449 = vadd.f32 %v362, %v448
        %v450 = vpop.f32.mrb[0].mxu0
        %451 = vdwg.mxu0
        %v452 = vmax.f32 %v446, 0.0
        %v453 = vmax.f32 %v449, 0.0
        %v454 = vpack.c.bf16 %v453, %v452
        %v455 = vld [vmem:[%s3] sm:$0xf]
        %v456 = vld [vmem:[%s3 + $0x4] sm:$0xf]
        %v457 = vld [vmem:[%s3 + $0x8] sm:$0xf]
        %v458 = vld [vmem:[%s3 + $0xc] sm:$0xf]
        %v459 = vld [vmem:[%s3 + $0x10] sm:$0xf]
        %v460 = vld [vmem:[%s3 + $0x14] sm:$0xf]
        %v461 = vld [vmem:[%s3 + $0x18] sm:$0xf]
        %v462 = vld [vmem:[%s3 + $0x1c] sm:$0xf]
        %v463 = vld [vmem:[%s3 + $0x20] sm:$0xf]
        %v464 = vld [vmem:[%s3 + $0x24] sm:$0xf]
        %v465 = vld [vmem:[%s3 + $0x28] sm:$0xf]
        %v466 = vld [vmem:[%s3 + $0x2c] sm:$0xf]
        %v467 = vld [vmem:[%s3 + $0x30] sm:$0xf]
        %v468 = vld [vmem:[%s3 + $0x34] sm:$0xf]
        %v469 = vld [vmem:[%s3 + $0x38] sm:$0xf]
        %v470 = vld [vmem:[%s3 + $0x3c] sm:$0xf]
        %v471 = vlaneseq
        %v472 = vshrl.u32 %v471, 7
        %v473 = vsub.s32 2, %v472
        %v474 = vrot.slane %v281, %v473
        %v491 = vunpack.c.l.b16 %v455
        %v492 = vunpack.c.l.b16 %v456
        %v493 = vunpack.c.l.b16 %v457
        %v494 = vunpack.c.l.b16 %v458
        %v495 = vunpack.c.l.b16 %v459
        %v496 = vunpack.c.l.b16 %v460
        %v497 = vunpack.c.l.b16 %v461
        %v498 = vunpack.c.l.b16 %v462
        %v499 = vunpack.c.l.b16 %v463
        %v500 = vunpack.c.l.b16 %v464
        %v501 = vunpack.c.l.b16 %v465
        %v502 = vunpack.c.l.b16 %v466
        %v503 = vunpack.c.l.b16 %v467
        %v504 = vunpack.c.l.b16 %v468
        %v505 = vunpack.c.l.b16 %v469
        %v506 = vunpack.c.l.b16 %v470
        %v507 = vpack.c.b16 %v492, %v491
        %v508 = vpack.c.b16 %v494, %v493
        %v509 = vpack.c.b16 %v496, %v495
        %v510 = vpack.c.b16 %v498, %v497
        %v511 = vpack.c.b16 %v500, %v499
        %v512 = vpack.c.b16 %v502, %v501
        %v513 = vpack.c.b16 %v504, %v503
        %v514 = vpack.c.b16 %v506, %v505
        %523 = vmatprep.subr.bf16.mxu0 0
        %524 = vmatpush1.bf16.msra.mxu0 %v507
        %525 = vmatprep.subr.bf16.mxu0 0
        %526 = vmatpush1.bf16.msra.mxu0 %v508
        %527 = vmatprep.subr.bf16.mxu0 0
        %528 = vmatpush1.bf16.msra.mxu0 %v509
        %529 = vmatprep.subr.bf16.mxu0 0
        %530 = vmatpush1.bf16.msra.mxu0 %v510
        %531 = vmatprep.subr.bf16.mxu0 0
        %532 = vmatpush1.bf16.msra.mxu0 %v511
        %533 = vmatprep.subr.bf16.mxu0 0
        %534 = vmatpush1.bf16.msra.mxu0 %v512
        %535 = vmatprep.subr.bf16.mxu0 0
        %536 = vmatpush1.bf16.msra.mxu0 %v513
        %537 = vmatprep.subr.bf16.mxu0 0
        %538 = vmatpush1.bf16.msra.mxu0 %v514
        %539 = vmatprep.subr.bf16.mxu0 0
        %540 = vmatpush1.bf16.msra.mxu0 0
        %541 = vmatprep.subr.bf16.mxu0 0
        %542 = vmatpush1.bf16.msra.mxu0 0
        %543 = vmatprep.subr.bf16.mxu0 0
        %544 = vmatpush1.bf16.msra.mxu0 0
        %545 = vmatprep.subr.bf16.mxu0 0
        %546 = vmatpush1.bf16.msra.mxu0 0
        %547 = vmatprep.subr.bf16.mxu0 0
        %548 = vmatpush1.bf16.msra.mxu0 0
        %549 = vmatprep.subr.bf16.mxu0 0
        %550 = vmatpush1.bf16.msra.mxu0 0
        %551 = vmatprep.subr.bf16.mxu0 0
        %552 = vmatpush1.bf16.msra.mxu0 0
        %553 = vmatprep.subr.bf16.mxu0 0
        %554 = vmatpush1.bf16.msra.mxu0 0
        %555 = vmatprep.mubr.bf16.mxu0 0
        %556 = vmatmul.mubr.bf16.gmra.mrb[0].mxu0 %v454
        %v557 = vpop.f32.mrb[0].mxu0
        %v558 = vadd.f32 %v474, %v557
        %v559 = vpop.f32.mrb[0].mxu0
        %v560 = vpop.f32.mrb[0].mxu0
        %v561 = vadd.f32 %v474, %v560
        %v562 = vpop.f32.mrb[0].mxu0
        %563 = vdwg.mxu0
        %564 = vst [vmem:[%s260] sm:$0xff] %v558
        %565 = vst [vmem:[%s260 + $0x8] sm:$0xff] %v561
        %s566 = sand.u32 %s139, 1
        %s567 = scalar_lea.sflag [#allocation4], %s566
        %s568 = sand.u32 %s139, 1
        %s569 = smul.addr %s568, 16
        %s570 = scalar_lea.vmem [#allocation7], %s569
        // Predicated region
        $region49: #{tpu_custom_call.1} parent=39 // pred_check
          %p571 = pneg %p149
        $region50: #{tpu_custom_call.1} parent=39 // pred_check_branch
          %573 = sbr.rel (%p571) target = $region52
        $region51: #{tpu_custom_call.1} parent=39 // pred_region
          %s574 = smul.u32 2, %s21
          %s575 = ssub.s32 5, %s574
          %p576 = scmp.lt.s32.totalorder %s575, 2
          %s577 = scalar_select %p576, %s575, 2
          %s578 = smul.u32 128, %s577
          %s580 = ssub.s32 256, %s578
          %581 = vsyncadd %s567, %s580
          %p582 = scmp.ne.s32.totalorder 0, %s578
          %s583 = smul.addr %s574, 128
          %s584 = scalar_lea.hbm %s5, %s583
          %s585 = smul.u32 8, %s577
          %s586 = sshll.u32 %s570, 4
          %s587 = int_to_ptr.vmem [resolvable:$true] %s586
          %s588 = sshll.u32 %s585, 4
          %592 = dma.vmem_to_hbm [thread:$0]  (%p582), %s587, %s588, %s584, %s567, 128, 128, 8
        $region52: #{tpu_custom_call.1} parent=39 // pred_fallthru
          _
      $region40: #{tpu_custom_call.1} parent=5 // pred_fallthru
        _
      %p593 = scmp.le.s32.totalorder 2, %s16
      // Predicated region
      $region53: #{tpu_custom_call.1} parent=5 // pred_check
        %p594 = pneg %p593
      $region54: #{tpu_custom_call.1} parent=5 // pred_check_branch
        %596 = sbr.rel (%p594) target = $region56
      $region55: #{tpu_custom_call.1} parent=5 // pred_region
        %s597 = ssub.s32 %s16, 2
        // Predicated region
        $region57: #{tpu_custom_call.1} parent=55 // pred_check
          %p598 = pneg %p155
        $region58: #{tpu_custom_call.1} parent=55 // pred_check_branch
          %600 = sbr.rel (%p598) target = $region60
        $region59: #{tpu_custom_call.1} parent=55 // pred_region
          %s601 = sand.u32 %s140, 1
          %s602 = scalar_lea.sflag [#allocation4], %s601
          %s603 = sand.u32 %s140, 1
          %s604 = smul.addr %s603, 16
          %s605 = scalar_lea.vmem [#allocation7], %s604
          %606 = dma.done %s602, 256
        $region60: #{tpu_custom_call.1} parent=55 // pred_fallthru
          _
      $region56: #{tpu_custom_call.1} parent=5 // pred_fallthru
        _
    $region6: #{tpu_custom_call.1} parent=1 // loop_footer
      %s20 = sadd.s32 1, %s16
    $region7: #{tpu_custom_call.1} parent=1 // loop_footer_branch
      %15 = sbr.rel target = $region3
    $region8: #{tpu_custom_call.1} parent=1 // loop_exit
      _
    %607 = vsyncpa [#allocation3], 1
    %s608 = scalar_lea.sflag [#allocation3], 1
    %609 = vsyncpa %s608, 1
    %610 = vsyncpa [#allocation6], 1
    %611 = vsyncpa [#allocation4], 1
    %s612 = scalar_lea.sflag [#allocation4], 1
    %613 = vsyncpa %s612, 1

// kernel: tpu_custom_call.1
$region0: #{tpu_custom_call.1}
  #allocation0 [shape = 'u32[]', space=smem, size = 0x4, offset = 0x4, fixed_abs, tag = 'smem constant byte address 0x4 - core index']
  #allocation1 [shape = 'u32[144,128]{1,0:T(1,128)}', space=vmem, size = 0x12000, scoped, tag = 'internal scratch']
  %s0 = inlined_call_operand.vmem [shape: f32[40,16], index: 0, kind: input, shape index: {}]
  %s1 = inlined_call_operand.hbm [shape: bf16[16,128], index: 1, kind: input, shape index: {}]
  %s2 = inlined_call_operand.hbm [shape: bf16[128,128], index: 2, kind: input, shape index: {}]
  %s3 = inlined_call_operand.vmem [shape: bf16[128,128], index: 3, kind: input, shape index: {}]
  %s4 = inlined_call_operand.vmem [shape: f32[3,128], index: 4, kind: input, shape index: {}]
  %s5 = inlined_call_operand.hbm [shape: f32[40,128], index: 5, kind: output, shape index: {}]
  %s6 = sld [smem:[#allocation0]]
  $region61: #{tpu_custom_call.1} parent=0
    _
  %s8 = ssub.s32 1, %s6
  %s9 = scalar_select 0, %s8, %s6
  $region1: #{tpu_custom_call.1} parent=0
    #allocation2 [shape = 'u8[4096]{0}', space=vmem, size = 0x1000, scoped, tag = 'input window, operand 1, single buffered']
    #allocation3 [shape = 's32[2]{0}', space=sflag, size = 0x8, scoped, tag = 'scoped memory for tpu_custom_call.1']
    #allocation4 [shape = 's32[2]{0}', space=sflag, size = 0x8, scoped, tag = 'scoped memory for tpu_custom_call.1']
    #allocation5 [shape = 'u8[32768]{0}', space=vmem, size = 0x8000, scoped, tag = 'input window, operand 2, single buffered']
    #allocation6 [shape = 's32[1]{0}', space=sflag, size = 0x4, scoped, tag = 'scoped memory for tpu_custom_call.1']
    #allocation7 [shape = 'u8[16384]{0}', space=vmem, size = 0x4000, scoped, tag = 'output window, operand 0']
    %10 = vsyncpa [#allocation3], 0
    %11 = vsyncpa [#allocation6], 0
    %12 = vsyncpa [#allocation4], 0
    %s13 = scalar_lea.sflag [#allocation4], 1
    %14 = vsyncpa %s13, 0
    loop: start=0, step=1, limit=5
    $region2: #{tpu_custom_call.1} parent=1 // loop_pre_header
      _
    $region3: #{tpu_custom_call.1} parent=1 // loop_header
      %s16 = sphi 0, %s20
      %p17 = scmp.ge.s32.totalorder %s16, 5
      %s26 = sphi 0, %s28
      %s29 = sphi 0, %s26
      %s30 = sphi 0, %s29
      %s46 = sphi 0, %s30
      %s50 = sphi 0, %s50
      %s52 = sphi 0, %s50
      %s53 = sphi 0, %s52
      %s67 = sphi 0, %s53
      %s71 = sphi 0, %s71
      %s73 = sphi 0, %s71
      %s74 = sphi 0, %s73
      %s88 = sphi 0, %s74
      %s92 = sphi 0, %s92
      %s94 = sphi 0, %s92
      %s95 = sphi 0, %s94
      %s109 = sphi 0, %s95
      %s113 = sphi 0, %s113
      %s115 = sphi 0, %s113
      %s116 = sphi 0, %s115
      %s130 = sphi 0, %s116
      %s136 = sphi 0, %s138
      %s139 = sphi 0, %s136
      %s140 = sphi 0, %s139
      %s156 = sphi 0, %s140
    $region4: #{tpu_custom_call.1} parent=1 // loop_header_branch
      %19 = sbr.rel (%p17) target = $region8
    $region5: #{tpu_custom_call.1} parent=1 // loop_body
      %s21 = ssub.s32 %s16, 1
      %s22 = ssub.s32 %s16, 2
      %s23 = sadd.s32 %s16, 1
      %s24 = ssub.s32 %s16, %s23
      %p25 = scmp.eq.s32.totalorder %s24, 0
      %s27 = sadd.s32 %s26, 1
      %s28 = scalar_select %p25, %s26, %s27
      %p31 = pneg %p25
      %p32 = scmp.eq.s32.totalorder %s16, 2
      %p33 = por %p31, %p32
      %p34 = scmp.ne.s32.totalorder %s26, %s29
      %p35 = scmp.eq.s32.totalorder %s16, 0
      %p36 = por %p34, %p35
      %p37 = scmp.ne.s32.totalorder %s26, %s29
      %p38 = scmp.eq.s32.totalorder %s21, 2
      %p39 = por %p37, %p38
      %p40 = scmp.ne.s32.totalorder %s29, %s30
      %p41 = scmp.eq.s32.totalorder %s21, 0
      %p42 = por %p40, %p41
      %p43 = scmp.ne.s32.totalorder %s29, %s30
      %p44 = scmp.eq.s32.totalorder %s22, 2
      %p45 = por %p43, %p44
      %p47 = scmp.ne.s32.totalorder %s30, %s46
      %p48 = scmp.eq.s32.totalorder %s22, 0
      %p49 = por %p47, %p48
      %s51 = sadd.s32 %s50, 1
      %p54 = scmp.eq.s32.totalorder %s16, 2
      %p55 = scmp.ne.s32.totalorder %s50, %s52
      %p56 = scmp.eq.s32.totalorder %s16, 0
      %p57 = por %p55, %p56
      %p58 = scmp.ne.s32.totalorder %s50, %s52
      %p59 = scmp.eq.s32.totalorder %s21, 2
      %p60 = por %p58, %p59
      %p61 = scmp.ne.s32.totalorder %s52, %s53
      %p62 = scmp.eq.s32.totalorder %s21, 0
      %p63 = por %p61, %p62
      %p64 = scmp.ne.s32.totalorder %s52, %s53
      %p65 = scmp.eq.s32.totalorder %s22, 2
      %p66 = por %p64, %p65
      %p68 = scmp.ne.s32.totalorder %s53, %s67
      %p69 = scmp.eq.s32.totalorder %s22, 0
      %p70 = por %p68, %p69
      %s72 = sadd.s32 %s71, 1
      %p75 = scmp.eq.s32.totalorder %s16, 2
      %p76 = scmp.ne.s32.totalorder %s71, %s73
      %p77 = scmp.eq.s32.totalorder %s16, 0
      %p78 = por %p76, %p77
      %p79 = scmp.ne.s32.totalorder %s71, %s73
      %p80 = scmp.eq.s32.totalorder %s21, 2
      %p81 = por %p79, %p80
      %p82 = scmp.ne.s32.totalorder %s73, %s74
      %p83 = scmp.eq.s32.totalorder %s21, 0
      %p84 = por %p82, %p83
      %p85 = scmp.ne.s32.totalorder %s73, %s74
      %p86 = scmp.eq.s32.totalorder %s22, 2
      %p87 = por %p85, %p86
      %p89 = scmp.ne.s32.totalorder %s74, %s88
      %p90 = scmp.eq.s32.totalorder %s22, 0
      %p91 = por %p89, %p90
      %s93 = sadd.s32 %s92, 1
      %p96 = scmp.eq.s32.totalorder %s16, 2
      %p97 = scmp.ne.s32.totalorder %s92, %s94
      %p98 = scmp.eq.s32.totalorder %s16, 0
      %p99 = por %p97, %p98
      %p100 = scmp.ne.s32.totalorder %s92, %s94
      %p101 = scmp.eq.s32.totalorder %s21, 2
      %p102 = por %p100, %p101
      %p103 = scmp.ne.s32.totalorder %s94, %s95
      %p104 = scmp.eq.s32.totalorder %s21, 0
      %p105 = por %p103, %p104
      %p106 = scmp.ne.s32.totalorder %s94, %s95
      %p107 = scmp.eq.s32.totalorder %s22, 2
      %p108 = por %p106, %p107
      %p110 = scmp.ne.s32.totalorder %s95, %s109
      %p111 = scmp.eq.s32.totalorder %s22, 0
      %p112 = por %p110, %p111
      %s114 = sadd.s32 %s113, 1
      %p117 = scmp.eq.s32.totalorder %s16, 2
      %p118 = scmp.ne.s32.totalorder %s113, %s115
      %p119 = scmp.eq.s32.totalorder %s16, 0
      %p120 = por %p118, %p119
      %p121 = scmp.ne.s32.totalorder %s113, %s115
      %p122 = scmp.eq.s32.totalorder %s21, 2
      %p123 = por %p121, %p122
      %p124 = scmp.ne.s32.totalorder %s115, %s116
      %p125 = scmp.eq.s32.totalorder %s21, 0
      %p126 = por %p124, %p125
      %p127 = scmp.ne.s32.totalorder %s115, %s116
      %p128 = scmp.eq.s32.totalorder %s22, 2
      %p129 = por %p127, %p128
      %p131 = scmp.ne.s32.totalorder %s116, %s130
      %p132 = scmp.eq.s32.totalorder %s22, 0
      %p133 = por %p131, %p132
      %s134 = ssub.s32 %s16, %s23
      %p135 = scmp.eq.s32.totalorder %s134, 0
      %s137 = sadd.s32 %s136, 1
      %s138 = scalar_select %p135, %s136, %s137
      %p141 = pneg %p135
      %p142 = scmp.eq.s32.totalorder %s16, 2
      %p143 = por %p141, %p142
      %p144 = scmp.ne.s32.totalorder %s136, %s139
      %p145 = scmp.eq.s32.totalorder %s16, 0
      %p146 = por %p144, %p145
      %p147 = scmp.ne.s32.totalorder %s136, %s139
      %p148 = scmp.eq.s32.totalorder %s21, 2
      %p149 = por %p147, %p148
      %p150 = scmp.ne.s32.totalorder %s139, %s140
      %p151 = scmp.eq.s32.totalorder %s21, 0
      %p152 = por %p150, %p151
      %p153 = scmp.ne.s32.totalorder %s139, %s140
      %p154 = scmp.eq.s32.totalorder %s22, 2
      %p155 = por %p153, %p154
      %p157 = scmp.ne.s32.totalorder %s140, %s156
      %p158 = scmp.eq.s32.totalorder %s22, 0
      %p159 = por %p157, %p158
      %p160 = scmp.le.s32.totalorder 1, %s16
      %p161 = scmp.lt.s32.totalorder %s16, 4
      %p162 = pnand %p160, %p161
      %p163 = pneg %p162
      // Predicated region
      $region9: #{tpu_custom_call.1} parent=5 // pred_check
        _
      $region10: #{tpu_custom_call.1} parent=5 // pred_check_branch
        %165 = sbr.rel (%p162) target = $region12
      $region11: #{tpu_custom_call.1} parent=5 // pred_region
        %s166 = ssub.s32 %s16, 1
        // Predicated region
        $region13: #{tpu_custom_call.1} parent=11 // pred_check
          %p167 = pneg %p63
        $region14: #{tpu_custom_call.1} parent=11 // pred_check_branch
          %169 = sbr.rel (%p167) target = $region16
        $region15: #{tpu_custom_call.1} parent=11 // pred_region
          %s171 = ssub.s32 128, 128
          %172 = vsyncadd [#allocation3], %s171
          %s173 = sshll.u32 [#allocation2], 4
          %s174 = int_to_ptr.vmem [resolvable:$true] %s173
          %179 = dma.hbm_to_vmem [thread:$0]  %s1, 128, %s174, [#allocation3], 64, 64, 4
        $region16: #{tpu_custom_call.1} parent=11 // pred_fallthru
          _
        // Predicated region
        $region17: #{tpu_custom_call.1} parent=11 // pred_check
          %p180 = pneg %p84
        $region18: #{tpu_custom_call.1} parent=11 // pred_check_branch
          %182 = sbr.rel (%p180) target = $region20
        $region19: #{tpu_custom_call.1} parent=11 // pred_region
          %s184 = ssub.s32 1024, 1024
          %185 = vsyncadd [#allocation6], %s184
          %s186 = sshll.u32 [#allocation5], 4
          %s187 = int_to_ptr.vmem [resolvable:$true] %s186
          %192 = dma.hbm_to_vmem [thread:$0]  %s2, 1024, %s187, [#allocation6], 64, 64, 4
        $region20: #{tpu_custom_call.1} parent=11 // pred_fallthru
          _
        // Predicated region
        $region21: #{tpu_custom_call.1} parent=11 // pred_check
          %p193 = pneg %p105
        $region22: #{tpu_custom_call.1} parent=11 // pred_check_branch
          %195 = sbr.rel (%p193) target = $region24
        $region23: #{tpu_custom_call.1} parent=11 // pred_region
          _
        $region24: #{tpu_custom_call.1} parent=11 // pred_fallthru
          _
        // Predicated region
        $region25: #{tpu_custom_call.1} parent=11 // pred_check
          %p196 = pneg %p126
        $region26: #{tpu_custom_call.1} parent=11 // pred_check_branch
          %198 = sbr.rel (%p196) target = $region28
        $region27: #{tpu_custom_call.1} parent=11 // pred_region
          _
        $region28: #{tpu_custom_call.1} parent=11 // pred_fallthru
          _
      $region12: #{tpu_custom_call.1} parent=5 // pred_fallthru
        _
      %p199 = scmp.lt.s32.totalorder %s16, 3
      // Predicated region
      $region29: #{tpu_custom_call.1} parent=5 // pred_check
        %p200 = pneg %p199
      $region30: #{tpu_custom_call.1} parent=5 // pred_check_branch
        %202 = sbr.rel (%p200) target = $region32
      $region31: #{tpu_custom_call.1} parent=5 // pred_region
        // Predicated region
        $region33: #{tpu_custom_call.1} parent=31 // pred_check
          %p203 = pneg %p36
        $region34: #{tpu_custom_call.1} parent=31 // pred_check_branch
          %205 = sbr.rel (%p203) target = $region36
        $region35: #{tpu_custom_call.1} parent=31 // pred_region
          %s206 = smul.u32 2, %s16
          %s207 = ssub.s32 5, %s206
          %p208 = scmp.lt.s32.totalorder %s207, 2
          %s209 = scalar_select %p208, %s207, 2
          %s210 = smul.u32 128, %s209
          %p211 = scmp.lt.s32.totalorder %s206, 4
          %s212 = scalar_select %p211, %s206, 4
          %s213 = smul.addr %s212, 8
          %s214 = scalar_lea.vmem %s0, %s213
          %s215 = smul.u32 2, %s16
          %s216 = ssub.s32 5, %s215
          %p217 = scmp.lt.s32.totalorder %s216, 2
          %s218 = scalar_select %p217, %s216, 2
          %s219 = smul.u32 128, %s218
        $region36: #{tpu_custom_call.1} parent=31 // pred_fallthru
          _
      $region32: #{tpu_custom_call.1} parent=5 // pred_fallthru
        _
      %p220 = scmp.le.s32.totalorder 1, %s16
      %p221 = scmp.lt.s32.totalorder %s16, 4
      %p222 = pnand %p220, %p221
      %p223 = pneg %p222
      // Predicated region
      $region37: #{tpu_custom_call.1} parent=5 // pred_check
        _
      $region38: #{tpu_custom_call.1} parent=5 // pred_check_branch
        %225 = sbr.rel (%p222) target = $region40
      $region39: #{tpu_custom_call.1} parent=5 // pred_region
        %s226 = ssub.s32 %s16, 1
        // Predicated region
        $region41: #{tpu_custom_call.1} parent=39 // pred_check
          %p227 = pneg %p63
        $region42: #{tpu_custom_call.1} parent=39 // pred_check_branch
          %229 = sbr.rel (%p227) target = $region44
        $region43: #{tpu_custom_call.1} parent=39 // pred_region
          %230 = dma.done [#allocation3], 128
        $region44: #{tpu_custom_call.1} parent=39 // pred_fallthru
          _
        // Predicated region
        $region45: #{tpu_custom_call.1} parent=39 // pred_check
          %p231 = pneg %p84
        $region46: #{tpu_custom_call.1} parent=39 // pred_check_branch
          %233 = sbr.rel (%p231) target = $region48
        $region47: #{tpu_custom_call.1} parent=39 // pred_region
          %234 = dma.done [#allocation6], 1024
        $region48: #{tpu_custom_call.1} parent=39 // pred_fallthru
          _
        %s235 = smul.u32 2, %s21
        %s236 = ssub.s32 5, %s235
        %p237 = scmp.lt.s32.totalorder %s236, 2
        %s238 = scalar_select %p237, %s236, 2
        %s239 = smul.u32 128, %s238
        %p240 = scmp.lt.s32.totalorder %s235, 4
        %s241 = scalar_select %p240, %s235, 4
        %s242 = smul.addr %s241, 8
        %s243 = scalar_lea.vmem %s0, %s242
        %p244 = pneg %p42
        %p245 = pneg %p39
        %p246 = pneg %p63
        %p247 = pneg %p60
        %p248 = pneg %p84
        %p249 = pneg %p81
        %p250 = pneg %p105
        %p251 = pneg %p102
        %p252 = pneg %p126
        %p253 = pneg %p123
        %p254 = pneg %p152
        %p255 = pneg %p149
        %s256 = sand.u32 %s139, 1
        %s257 = scalar_lea.sflag [#allocation4], %s256
        %s258 = sand.u32 %s139, 1
        %s259 = smul.addr %s258, 16
        %s260 = scalar_lea.vmem [#allocation7], %s259
        %s261 = smul.u32 2, %s21
        %s262 = ssub.s32 5, %s261
        %p263 = scmp.lt.s32.totalorder %s262, 2
        %s264 = scalar_select %p263, %s262, 2
        %s265 = smul.u32 128, %s264
        %p266 = scmp.lt.s32.totalorder %s261, 4
        %s267 = scalar_select %p266, %s261, 4
        %s268 = smul.addr %s267, 8
        %s269 = scalar_lea.vmem %s0, %s268
        %s270 = smul.u32 2, %s21
        %s271 = ssub.s32 5, %s270
        %p272 = scmp.lt.s32.totalorder %s271, 2
        %s273 = scalar_select %p272, %s271, 2
        %s274 = smul.u32 128, %s273
        %s275 = smul.u32 2, %s21
        %s276 = ssub.s32 5, %s275
        %p277 = scmp.lt.s32.totalorder %s276, 2
        %s278 = scalar_select %p277, %s276, 2
        %s279 = smul.u32 128, %s278
        %v281 = vld [vmem:[%s4] sm:$0x7]
        %v282 = vld [vmem:[%s269] sm:$0xff]
        %v283 = vld [vmem:[%s269 + $0x8] sm:$0xff]
        %v284 = vpack.c.bf16 %v283, %v282
        %v285 = vld [vmem:[#allocation2] sm:$0xf]
        %v286 = vld [vmem:[#allocation2 + $0x4] sm:$0xf]
        %v287 = vlaneseq
        %v288 = vshrl.u32 %v287, 7
        %v289 = vsub.s32 0, %v288
        %v290 = vrot.slane %v281, %v289
        %v293 = vunpack.c.l.b16 %v285
        %v294 = vunpack.c.l.b16 %v286
        %v295 = vpack.c.b16 %v294, %v293
        %vm297 = vcmask 130048
        %v299 = vsel %vm297, %v284, 0
        %301 = vmatprep.subr.bf16.mxu0 0
        %302 = vmatpush1.bf16.msra.mxu0 %v295
        %303 = vmatprep.subr.bf16.mxu0 0
        %304 = vmatpush1.bf16.msra.mxu0 0
        %305 = vmatprep.subr.bf16.mxu0 0
        %306 = vmatpush1.bf16.msra.mxu0 0
        %307 = vmatprep.subr.bf16.mxu0 0
        %308 = vmatpush1.bf16.msra.mxu0 0
        %309 = vmatprep.subr.bf16.mxu0 0
        %310 = vmatpush1.bf16.msra.mxu0 0
        %311 = vmatprep.subr.bf16.mxu0 0
        %312 = vmatpush1.bf16.msra.mxu0 0
        %313 = vmatprep.subr.bf16.mxu0 0
        %314 = vmatpush1.bf16.msra.mxu0 0
        %315 = vmatprep.subr.bf16.mxu0 0
        %316 = vmatpush1.bf16.msra.mxu0 0
        %317 = vmatprep.subr.bf16.mxu0 0
        %318 = vmatpush1.bf16.msra.mxu0 0
        %319 = vmatprep.subr.bf16.mxu0 0
        %320 = vmatpush1.bf16.msra.mxu0 0
        %321 = vmatprep.subr.bf16.mxu0 0
        %322 = vmatpush1.bf16.msra.mxu0 0
        %323 = vmatprep.subr.bf16.mxu0 0
        %324 = vmatpush1.bf16.msra.mxu0 0
        %325 = vmatprep.subr.bf16.mxu0 0
        %326 = vmatpush1.bf16.msra.mxu0 0
        %327 = vmatprep.subr.bf16.mxu0 0
        %328 = vmatpush1.bf16.msra.mxu0 0
        %329 = vmatprep.subr.bf16.mxu0 0
        %330 = vmatpush1.bf16.msra.mxu0 0
        %331 = vmatprep.subr.bf16.mxu0 0
        %332 = vmatpush1.bf16.msra.mxu0 0
        %333 = vmatprep.mubr.bf16.mxu0 0
        %334 = vmatmul.mubr.bf16.gmra.mrb[0].mxu0 %v299
        %v335 = vpop.f32.mrb[0].mxu0
        %v336 = vadd.f32 %v290, %v335
        %v337 = vpop.f32.mrb[0].mxu0
        %v338 = vpop.f32.mrb[0].mxu0
        %v339 = vadd.f32 %v290, %v338
        %v340 = vpop.f32.mrb[0].mxu0
        %341 = vdwg.mxu0
        %v342 = vpack.c.bf16 %v339, %v336
        %v343 = vld [vmem:[#allocation5] sm:$0xf]
        %v344 = vld [vmem:[#allocation5 + $0x4] sm:$0xf]
        %v345 = vld [vmem:[#allocation5 + $0x8] sm:$0xf]
        %v346 = vld [vmem:[#allocation5 + $0xc] sm:$0xf]
        %v347 = vld [vmem:[#allocation5 + $0x10] sm:$0xf]
        %v348 = vld [vmem:[#allocation5 + $0x14] sm:$0xf]
        %v349 = vld [vmem:[#allocation5 + $0x18] sm:$0xf]
        %v350 = vld [vmem:[#allocation5 + $0x1c] sm:$0xf]
        %v351 = vld [vmem:[#allocation5 + $0x20] sm:$0xf]
        %v352 = vld [vmem:[#allocation5 + $0x24] sm:$0xf]
        %v353 = vld [vmem:[#allocation5 + $0x28] sm:$0xf]
        %v354 = vld [vmem:[#allocation5 + $0x2c] sm:$0xf]
        %v355 = vld [vmem:[#allocation5 + $0x30] sm:$0xf]
        %v356 = vld [vmem:[#allocation5 + $0x34] sm:$0xf]
        %v357 = vld [vmem:[#allocation5 + $0x38] sm:$0xf]
        %v358 = vld [vmem:[#allocation5 + $0x3c] sm:$0xf]
        %v359 = vlaneseq
        %v360 = vshrl.u32 %v359, 7
        %v361 = vsub.s32 1, %v360
        %v362 = vrot.slane %v281, %v361
        %v379 = vunpack.c.l.b16 %v343
        %v380 = vunpack.c.l.b16 %v344
        %v381 = vunpack.c.l.b16 %v345
        %v382 = vunpack.c.l.b16 %v346
        %v383 = vunpack.c.l.b16 %v347
        %v384 = vunpack.c.l.b16 %v348
        %v385 = vunpack.c.l.b16 %v349
        %v386 = vunpack.c.l.b16 %v350
        %v387 = vunpack.c.l.b16 %v351
        %v388 = vunpack.c.l.b16 %v352
        %v389 = vunpack.c.l.b16 %v353
        %v390 = vunpack.c.l.b16 %v354
        %v391 = vunpack.c.l.b16 %v355
        %v392 = vunpack.c.l.b16 %v356
        %v393 = vunpack.c.l.b16 %v357
        %v394 = vunpack.c.l.b16 %v358
        %v395 = vpack.c.b16 %v380, %v379
        %v396 = vpack.c.b16 %v382, %v381
        %v397 = vpack.c.b16 %v384, %v383
        %v398 = vpack.c.b16 %v386, %v385
        %v399 = vpack.c.b16 %v388, %v387
        %v400 = vpack.c.b16 %v390, %v389
        %v401 = vpack.c.b16 %v392, %v391
        %v402 = vpack.c.b16 %v394, %v393
        %411 = vmatprep.subr.bf16.mxu0 0
        %412 = vmatpush1.bf16.msra.mxu0 %v395
        %413 = vmatprep.subr.bf16.mxu0 0
        %414 = vmatpush1.bf16.msra.mxu0 %v396
        %415 = vmatprep.subr.bf16.mxu0 0
        %416 = vmatpush1.bf16.msra.mxu0 %v397
        %417 = vmatprep.subr.bf16.mxu0 0
        %418 = vmatpush1.bf16.msra.mxu0 %v398
        %419 = vmatprep.subr.bf16.mxu0 0
        %420 = vmatpush1.bf16.msra.mxu0 %v399
        %421 = vmatprep.subr.bf16.mxu0 0
        %422 = vmatpush1.bf16.msra.mxu0 %v400
        %423 = vmatprep.subr.bf16.mxu0 0
        %424 = vmatpush1.bf16.msra.mxu0 %v401
        %425 = vmatprep.subr.bf16.mxu0 0
        %426 = vmatpush1.bf16.msra.mxu0 %v402
        %427 = vmatprep.subr.bf16.mxu0 0
        %428 = vmatpush1.bf16.msra.mxu0 0
        %429 = vmatprep.subr.bf16.mxu0 0
        %430 = vmatpush1.bf16.msra.mxu0 0
        %431 = vmatprep.subr.bf16.mxu0 0
        %432 = vmatpush1.bf16.msra.mxu0 0
        %433 = vmatprep.subr.bf16.mxu0 0
        %434 = vmatpush1.bf16.msra.mxu0 0
        %435 = vmatprep.subr.bf16.mxu0 0
        %436 = vmatpush1.bf16.msra.mxu0 0
        %437 = vmatprep.subr.bf16.mxu0 0
        %438 = vmatpush1.bf16.msra.mxu0 0
        %439 = vmatprep.subr.bf16.mxu0 0
        %440 = vmatpush1.bf16.msra.mxu0 0
        %441 = vmatprep.subr.bf16.mxu0 0
        %442 = vmatpush1.bf16.msra.mxu0 0
        %443 = vmatprep.mubr.bf16.mxu0 0
        %444 = vmatmul.mubr.bf16.gmra.mrb[0].mxu0 %v342
        %v445 = vpop.f32.mrb[0].mxu0
        %v446 = vadd.f32 %v362, %v445
        %v447 = vpop.f32.mrb[0].mxu0
        %v448 = vpop.f32.mrb[0].mxu0
        %v449 = vadd.f32 %v362, %v448
        %v450 = vpop.f32.mrb[0].mxu0
        %451 = vdwg.mxu0
        %v452 = vmax.f32 %v446, 0.0
        %v453 = vmax.f32 %v449, 0.0
        %v454 = vpack.c.bf16 %v453, %v452
        %v455 = vld [vmem:[%s3] sm:$0xf]
        %v456 = vld [vmem:[%s3 + $0x4] sm:$0xf]
        %v457 = vld [vmem:[%s3 + $0x8] sm:$0xf]
        %v458 = vld [vmem:[%s3 + $0xc] sm:$0xf]
        %v459 = vld [vmem:[%s3 + $0x10] sm:$0xf]
        %v460 = vld [vmem:[%s3 + $0x14] sm:$0xf]
        %v461 = vld [vmem:[%s3 + $0x18] sm:$0xf]
        %v462 = vld [vmem:[%s3 + $0x1c] sm:$0xf]
        %v463 = vld [vmem:[%s3 + $0x20] sm:$0xf]
        %v464 = vld [vmem:[%s3 + $0x24] sm:$0xf]
        %v465 = vld [vmem:[%s3 + $0x28] sm:$0xf]
        %v466 = vld [vmem:[%s3 + $0x2c] sm:$0xf]
        %v467 = vld [vmem:[%s3 + $0x30] sm:$0xf]
        %v468 = vld [vmem:[%s3 + $0x34] sm:$0xf]
        %v469 = vld [vmem:[%s3 + $0x38] sm:$0xf]
        %v470 = vld [vmem:[%s3 + $0x3c] sm:$0xf]
        %v471 = vlaneseq
        %v472 = vshrl.u32 %v471, 7
        %v473 = vsub.s32 2, %v472
        %v474 = vrot.slane %v281, %v473
        %v491 = vunpack.c.l.b16 %v455
        %v492 = vunpack.c.l.b16 %v456
        %v493 = vunpack.c.l.b16 %v457
        %v494 = vunpack.c.l.b16 %v458
        %v495 = vunpack.c.l.b16 %v459
        %v496 = vunpack.c.l.b16 %v460
        %v497 = vunpack.c.l.b16 %v461
        %v498 = vunpack.c.l.b16 %v462
        %v499 = vunpack.c.l.b16 %v463
        %v500 = vunpack.c.l.b16 %v464
        %v501 = vunpack.c.l.b16 %v465
        %v502 = vunpack.c.l.b16 %v466
        %v503 = vunpack.c.l.b16 %v467
        %v504 = vunpack.c.l.b16 %v468
        %v505 = vunpack.c.l.b16 %v469
        %v506 = vunpack.c.l.b16 %v470
        %v507 = vpack.c.b16 %v492, %v491
        %v508 = vpack.c.b16 %v494, %v493
        %v509 = vpack.c.b16 %v496, %v495
        %v510 = vpack.c.b16 %v498, %v497
        %v511 = vpack.c.b16 %v500, %v499
        %v512 = vpack.c.b16 %v502, %v501
        %v513 = vpack.c.b16 %v504, %v503
        %v514 = vpack.c.b16 %v506, %v505
        %523 = vmatprep.subr.bf16.mxu0 0
        %524 = vmatpush1.bf16.msra.mxu0 %v507
        %525 = vmatprep.subr.bf16.mxu0 0
        %526 = vmatpush1.bf16.msra.mxu0 %v508
        %527 = vmatprep.subr.bf16.mxu0 0
        %528 = vmatpush1.bf16.msra.mxu0 %v509
        %529 = vmatprep.subr.bf16.mxu0 0
        %530 = vmatpush1.bf16.msra.mxu0 %v510
        %531 = vmatprep.subr.bf16.mxu0 0
        %532 = vmatpush1.bf16.msra.mxu0 %v511
        %533 = vmatprep.subr.bf16.mxu0 0
        %534 = vmatpush1.bf16.msra.mxu0 %v512
        %535 = vmatprep.subr.bf16.mxu0 0
        %536 = vmatpush1.bf16.msra.mxu0 %v513
        %537 = vmatprep.subr.bf16.mxu0 0
        %538 = vmatpush1.bf16.msra.mxu0 %v514
        %539 = vmatprep.subr.bf16.mxu0 0
        %540 = vmatpush1.bf16.msra.mxu0 0
        %541 = vmatprep.subr.bf16.mxu0 0
        %542 = vmatpush1.bf16.msra.mxu0 0
        %543 = vmatprep.subr.bf16.mxu0 0
        %544 = vmatpush1.bf16.msra.mxu0 0
        %545 = vmatprep.subr.bf16.mxu0 0
        %546 = vmatpush1.bf16.msra.mxu0 0
        %547 = vmatprep.subr.bf16.mxu0 0
        %548 = vmatpush1.bf16.msra.mxu0 0
        %549 = vmatprep.subr.bf16.mxu0 0
        %550 = vmatpush1.bf16.msra.mxu0 0
        %551 = vmatprep.subr.bf16.mxu0 0
        %552 = vmatpush1.bf16.msra.mxu0 0
        %553 = vmatprep.subr.bf16.mxu0 0
        %554 = vmatpush1.bf16.msra.mxu0 0
        %555 = vmatprep.mubr.bf16.mxu0 0
        %556 = vmatmul.mubr.bf16.gmra.mrb[0].mxu0 %v454
        %v557 = vpop.f32.mrb[0].mxu0
        %v558 = vadd.f32 %v474, %v557
        %v559 = vpop.f32.mrb[0].mxu0
        %v560 = vpop.f32.mrb[0].mxu0
        %v561 = vadd.f32 %v474, %v560
        %v562 = vpop.f32.mrb[0].mxu0
        %563 = vdwg.mxu0
        %564 = vst [vmem:[%s260] sm:$0xff] %v558
        %565 = vst [vmem:[%s260 + $0x8] sm:$0xff] %v561
        %s566 = sand.u32 %s139, 1
        %s567 = scalar_lea.sflag [#allocation4], %s566
        %s568 = sand.u32 %s139, 1
        %s569 = smul.addr %s568, 16
        %s570 = scalar_lea.vmem [#allocation7], %s569
        // Predicated region
        $region49: #{tpu_custom_call.1} parent=39 // pred_check
          %p571 = pneg %p149
        $region50: #{tpu_custom_call.1} parent=39 // pred_check_branch
          %573 = sbr.rel (%p571) target = $region52
        $region51: #{tpu_custom_call.1} parent=39 // pred_region
          %s574 = smul.u32 2, %s21
          %s575 = ssub.s32 5, %s574
          %p576 = scmp.lt.s32.totalorder %s575, 2
          %s577 = scalar_select %p576, %s575, 2
          %s578 = smul.u32 128, %s577
          %s580 = ssub.s32 256, %s578
          %581 = vsyncadd %s567, %s580
          %p582 = scmp.ne.s32.totalorder 0, %s578
          %s583 = smul.addr %s574, 128
          %s584 = scalar_lea.hbm %s5, %s583
          %s585 = smul.u32 8, %s577
          %s586 = sshll.u32 %s570, 4
          %s587 = int_to_ptr.vmem [resolvable:$true] %s586
          %s588 = sshll.u32 %s585, 4
          %592 = dma.vmem_to_hbm [thread:$0]  (%p582), %s587, %s588, %s584, %s567, 128, 128, 8
        $region52: #{tpu_custom_call.1} parent=39 // pred_fallthru
          _
      $region40: #{tpu_custom_call.1} parent=5 // pred_fallthru
        _
      %p593 = scmp.le.s32.totalorder 2, %s16
      // Predicated region
      $region53: #{tpu_custom_call.1} parent=5 // pred_check
        %p594 = pneg %p593
      $region54: #{tpu_custom_call.1} parent=5 // pred_check_branch
        %596 = sbr.rel (%p594) target = $region56
      $region55: #{tpu_custom_call.1} parent=5 // pred_region
        %s597 = ssub.s32 %s16, 2
        // Predicated region
        $region57: #{tpu_custom_call.1} parent=55 // pred_check
          %p598 = pneg %p155
        $region58: #{tpu_custom_call.1} parent=55 // pred_check_branch
          %600 = sbr.rel (%p598) target = $region60
        $region59: #{tpu_custom_call.1} parent=55 // pred_region
          %s601 = sand.u32 %s140, 1
          %s602 = scalar_lea.sflag [#allocation4], %s601
          %s603 = sand.u32 %s140, 1
          %s604 = smul.addr %s603, 16
          %s605 = scalar_lea.vmem [#allocation7], %s604
          %606 = dma.done %s602, 256
        $region60: #{tpu_custom_call.1} parent=55 // pred_fallthru
          _
      $region56: #{tpu_custom_call.1} parent=5 // pred_fallthru
        _
    $region6: #{tpu_custom_call.1} parent=1 // loop_footer
      %s20 = sadd.s32 1, %s16
    $region7: #{tpu_custom_call.1} parent=1 // loop_footer_branch
      %15 = sbr.rel target = $region3
    $region8: #{tpu_custom_call.1} parent=1 // loop_exit
      _
    %607 = vsyncpa [#allocation3], 1
    %s608 = scalar_lea.sflag [#allocation3], 1
    %609 = vsyncpa %s608, 1
    %610 = vsyncpa [#allocation6], 1
    %611 = vsyncpa [#allocation4], 1
    %s612 = scalar_lea.sflag [#allocation4], 1
    %613 = vsyncpa %s612, 1

</llo_original>
